<compile_context>
chip_gen: v6e
topology: v6e:2x2x1
jax: 0.10.0
libtpu: 0.0.40
codegen_flags: <defaults>
</compile_context>

<pallas_src>
import functools
import math

import jax
import jax.numpy as jnp
from jax import lax
from jax.experimental import pallas as pl
from jax.experimental.pallas import tpu as pltpu


def _patch_embed_kernel(p_ref, w_ref, b_ref, g_ref, beta_ref, o_ref, *, eps, inv_e):
    # Patch projection on the MXU, accumulate in f32.
    acc = jnp.dot(p_ref[...], w_ref[...], preferred_element_type=jnp.float32)
    acc = acc + b_ref[...].astype(jnp.float32)                 # (TM, E) + (1, E)

    # One-pass LayerNorm statistics over the embedding (lane) axis: the two
    # cross-lane reductions can issue back-to-back on the XLU.
    s1 = jnp.sum(acc, axis=-1, keepdims=True)
    s2 = jnp.sum(acc * acc, axis=-1, keepdims=True)
    mean = s1 * inv_e
    var = jnp.maximum(s2 * inv_e - mean * mean, 0.0)           # guard fp cancellation
    xhat = (acc - mean) * lax.rsqrt(var + eps)
    out = xhat * g_ref[...].astype(jnp.float32) + beta_ref[...].astype(jnp.float32)

    o_ref[...] = out.astype(o_ref.dtype)


def patch_embedding_pallas(x, w, b, gamma, beta, *, patch_size, eps=1e-5,
                           flatten=True, tile_m=512, operand_dtype=None,
                           out_dtype=None):
    """Pallas equivalent of PatchEmbedding.forward (flatten=True path).

    x:     (B, C, H, W)   NCHW input
    w:     (E, C, P, P)   Conv2d weight (kernel_size = stride = patch_size)
    b:     (E,)           Conv2d bias
    gamma: (E,)           LayerNorm weight
    beta:  (E,)           LayerNorm bias
    operand_dtype: optional dtype (e.g. jnp.bfloat16) for the matmul operands;
                   accumulation and LayerNorm math stay f32.
    Returns (B, num_patches, E).
    """
    if not flatten:
        # TODO(synk): BatchNorm2d (flatten=False) branch not implemented.
        raise NotImplementedError("flatten=False (BatchNorm2d) path not implemented")

    B, C, H, W = x.shape
    E = w.shape[0]
    P = patch_size
    G_h, G_w = H // P, W // P
    N = G_h * G_w
    K = C * P * P
    M = B * N

    if out_dtype is None:
        out_dtype = x.dtype
    if operand_dtype is not None:
        # Cast BEFORE the im2col copy so the transpose itself moves half the bytes.
        x = x.astype(operand_dtype)
        w = w.astype(operand_dtype)

    # ---- layout plumbing (single XLA copy, no pads): im2col -----------------
    # patches[(b, gh, gw), (c, ph, pw)] matches conv + flatten(2).transpose(1,2).
    patches = x.reshape(B, C, G_h, P, G_w, P)
    patches = patches.transpose(0, 2, 4, 1, 3, 5).reshape(M, K)
    w_k = w.reshape(E, K).T                                     # (K, E)

    # ---- row tiling: no padding copy; Pallas masks the partial last block ----
    if M <= tile_m:
        TM = M                          # single full-extent block (always legal)
    else:
        assert tile_m % 8 == 0, "tile_m must be a multiple of 8"
        TM = tile_m
    grid_m = pl.cdiv(M, TM)

    b2 = b.reshape(1, E)
    g2 = gamma.reshape(1, E)
    be2 = beta.reshape(1, E)

    in_item = jnp.dtype(patches.dtype).itemsize
    out_item = jnp.dtype(out_dtype).itemsize

    # VMEM budget: double-buffered row tiles + (resident, but 2-buffered by
    # default) weight/params.  2x headroom, clamped to [32 MiB, 64 MiB] so the
    # same config fits v5e/v6e (128 MiB) and v7x (64 MiB) physical VMEM.
    vmem_bytes = 2 * (TM * K + TM * E) * max(in_item, 4) + 2 * (K * E + 3 * E) * in_item
    vmem_limit = int(min(max(2 * vmem_bytes, 32 * 2 ** 20), 64 * 2 ** 20))

    cost = pl.CostEstimate(
        flops=int(2 * M * K * E + 8 * M * E),
        transcendentals=int(M),
        bytes_accessed=int((M * K + K * E + 3 * E) * in_item + M * E * out_item),
    )

    kernel = functools.partial(_patch_embed_kernel, eps=float(eps), inv_e=1.0 / float(E))

    out = pl.pallas_call(
        kernel,
        out_shape=jax.ShapeDtypeStruct((M, E), out_dtype),
        grid_spec=pltpu.PrefetchScalarGridSpec(
            num_scalar_prefetch=0,
            grid=(grid_m,),
            in_specs=[
                pl.BlockSpec((TM, K), lambda i: (i, 0)),   # patch rows (streamed)
                pl.BlockSpec((K, E), lambda i: (0, 0)),    # projection weight (resident)
                pl.BlockSpec((1, E), lambda i: (0, 0)),    # conv bias
                pl.BlockSpec((1, E), lambda i: (0, 0)),    # LN gamma
                pl.BlockSpec((1, E), lambda i: (0, 0)),    # LN beta
            ],
            out_specs=pl.BlockSpec((TM, E), lambda i: (i, 0)),
        ),
        compiler_params=pltpu.CompilerParams(
            dimension_semantics=("parallel",),   # independent row tiles -> megacore-shardable
            vmem_limit_bytes=vmem_limit,
        ),
        cost_estimate=cost,
    )(patches, w_k, b2, g2, be2)

    return out.reshape(B, N, E)


def _reference(x, w, b, gamma, beta, patch_size, eps=1e-5):
    B, C, H, W = x.shape
    E = w.shape[0]
    P = patch_size
    G = H // P
    conv = lax.conv_general_dilated(
        x, w, window_strides=(P, P), padding="VALID",
        dimension_numbers=("NCHW", "OIHW", "NCHW"),
        precision=lax.Precision.HIGHEST,
    ) + b.reshape(1, E, 1, 1)
    ref = conv.reshape(B, E, G * G).transpose(0, 2, 1)
    mu = ref.mean(-1, keepdims=True)
    var = ((ref - mu) ** 2).mean(-1, keepdims=True)
    return (ref - mu) * lax.rsqrt(var + eps) * gamma + beta


if __name__ == "__main__":
    key = jax.random.PRNGKey(0)
    k1, k2, k3, k4, k5 = jax.random.split(key, 5)

    # Primary small config: B=2, C=4, img=16, patch=8, E=128.
    B, C, IMG, P, E = 2, 4, 16, 8, 128
    G = IMG // P
    K = C * P * P

    x = jax.random.normal(k1, (B, C, IMG, IMG), dtype=jnp.float32)
    w = jax.random.normal(k2, (E, C, P, P), dtype=jnp.float32) * (1.0 / math.sqrt(K))
    b = 0.02 * jax.random.normal(k3, (E,), dtype=jnp.float32)
    gamma = 1.0 + 0.1 * jax.random.normal(k4, (E,), dtype=jnp.float32)
    beta = 0.1 * jax.random.normal(k5, (E,), dtype=jnp.float32)

    ref = _reference(x, w, b, gamma, beta, P)

    # 1) f32 path, single block.
    out = patch_embedding_pallas(x, w, b, gamma, beta, patch_size=P)
    out = jax.block_until_ready(out)
    assert out.shape == (B, G * G, E), out.shape
    assert out.dtype == x.dtype
    err = float(jnp.max(jnp.abs(out - ref)))
    assert err < 5e-2, f"f32 max abs err {err}"

    # 2) bf16-operand path (f32 accumulation / LN), looser tolerance.
    out_bf = patch_embedding_pallas(x, w, b, gamma, beta, patch_size=P,
                                    operand_dtype=jnp.bfloat16)
    out_bf = jax.block_until_ready(out_bf)
    err_bf = float(jnp.max(jnp.abs(out_bf - ref)))
    assert err_bf < 2e-1, f"bf16 max abs err {err_bf}"

    # 3) Multi-step grid with a partial (masked) final block: M=48, TM=32.
    B2, IMG2 = 3, 32
    G2 = IMG2 // P
    x2 = jax.random.normal(jax.random.PRNGKey(1), (B2, C, IMG2, IMG2), dtype=jnp.float32)
    ref2 = _reference(x2, w, b, gamma, beta, P)
    out2 = patch_embedding_pallas(x2, w, b, gamma, beta, patch_size=P, tile_m=32)
    out2 = jax.block_until_ready(out2)
    assert out2.shape == (B2, G2 * G2, E), out2.shape
    err2 = float(jnp.max(jnp.abs(out2 - ref2)))
    assert err2 < 5e-2, f"partial-block max abs err {err2}"

    print("KERNEL_OK")
</pallas_src>

<mosaic_0001>
module attributes {stable_mosaic.version = 11 : i64} {
  func.func @_patch_embed_kernel(%arg0: i32, %arg1: memref<8x256xf32, #tpu.memory_space<vmem>>, %arg2: memref<256x128xf32, #tpu.memory_space<vmem>>, %arg3: memref<1x128xf32, #tpu.memory_space<vmem>>, %arg4: memref<1x128xf32, #tpu.memory_space<vmem>>, %arg5: memref<1x128xf32, #tpu.memory_space<vmem>>, %arg6: memref<8x128xf32, #tpu.memory_space<vmem>>) attributes {dimension_semantics = [#tpu.dimension_semantics<parallel>], iteration_bounds = array<i64: 1>, scalar_prefetch = 0 : i64, scratch_operands = 0 : i64, tpu.core_type = #tpu.core_type<tc>, window_params = [{transform_indices = @transform_0, window_bounds = array<i64: 8, 256>}, {pipeline_mode = #tpu.pipeline_mode<synchronous>, transform_indices = @transform_1, window_bounds = array<i64: 256, 128>}, {pipeline_mode = #tpu.pipeline_mode<synchronous>, transform_indices = @transform_2, window_bounds = array<i64: 1, 128>}, {pipeline_mode = #tpu.pipeline_mode<synchronous>, transform_indices = @transform_3, window_bounds = array<i64: 1, 128>}, {pipeline_mode = #tpu.pipeline_mode<synchronous>, transform_indices = @transform_4, window_bounds = array<i64: 1, 128>}, {transform_indices = @transform_5, window_bounds = array<i64: 8, 128>}]} {
    %c0 = arith.constant 0 : index
    %c0_0 = arith.constant 0 : index
    %0 = vector.load %arg1[%c0, %c0_0] : memref<8x256xf32, #tpu.memory_space<vmem>>, vector<8x256xf32>
    %c0_1 = arith.constant 0 : index
    %c0_2 = arith.constant 0 : index
    %1 = vector.load %arg2[%c0_1, %c0_2] : memref<256x128xf32, #tpu.memory_space<vmem>>, vector<256x128xf32>
    %cst = arith.constant dense<0.000000e+00> : vector<8x128xf32>
    %2 = tpu.matmul %0, %1, %cst {dimension_numbers = #tpu.dot_dimension_numbers<[1], [0], [0], [1], [0, 0, 1, 1], [], []>} : vector<8x256xf32>, vector<256x128xf32>, vector<8x128xf32> -> vector<8x128xf32>
    %c0_3 = arith.constant 0 : index
    %c0_4 = arith.constant 0 : index
    %3 = vector.load %arg3[%c0_3, %c0_4] : memref<1x128xf32, #tpu.memory_space<vmem>>, vector<1x128xf32>
    %4 = vector.broadcast %3 : vector<1x128xf32> to vector<8x128xf32>
    %5 = arith.addf %2, %4 : vector<8x128xf32>
    %cst_5 = arith.constant dense<0.000000e+00> : vector<8xf32>
    %6 = vector.multi_reduction <add>, %5, %cst_5 [1] : vector<8x128xf32> to vector<8xf32>
    %7 = vector.shape_cast %6 : vector<8xf32> to vector<8x1xf32>
    %8 = arith.mulf %5, %5 : vector<8x128xf32>
    %cst_6 = arith.constant dense<0.000000e+00> : vector<8xf32>
    %9 = vector.multi_reduction <add>, %8, %cst_6 [1] : vector<8x128xf32> to vector<8xf32>
    %10 = vector.shape_cast %9 : vector<8xf32> to vector<8x1xf32>
    %cst_7 = arith.constant 7.812500e-03 : f32
    %11 = vector.broadcast %cst_7 : f32 to vector<8x1xf32>
    %12 = arith.mulf %7, %11 : vector<8x1xf32>
    %cst_8 = arith.constant 7.812500e-03 : f32
    %13 = vector.broadcast %cst_8 : f32 to vector<8x1xf32>
    %14 = arith.mulf %10, %13 : vector<8x1xf32>
    %15 = arith.mulf %12, %12 : vector<8x1xf32>
    %16 = arith.subf %14, %15 : vector<8x1xf32>
    %cst_9 = arith.constant 0.000000e+00 : f32
    %17 = vector.broadcast %cst_9 : f32 to vector<8x1xf32>
    %18 = arith.maximumf %16, %17 : vector<8x1xf32>
    %19 = vector.broadcast %12 : vector<8x1xf32> to vector<8x128xf32>
    %20 = arith.subf %5, %19 : vector<8x128xf32>
    %cst_10 = arith.constant 9.99999974E-6 : f32
    %21 = vector.broadcast %cst_10 : f32 to vector<8x1xf32>
    %22 = arith.addf %18, %21 : vector<8x1xf32>
    %23 = math.rsqrt %22 : vector<8x1xf32>
    %24 = vector.broadcast %23 : vector<8x1xf32> to vector<8x128xf32>
    %25 = arith.mulf %20, %24 : vector<8x128xf32>
    %c0_11 = arith.constant 0 : index
    %c0_12 = arith.constant 0 : index
    %26 = vector.load %arg4[%c0_11, %c0_12] : memref<1x128xf32, #tpu.memory_space<vmem>>, vector<1x128xf32>
    %27 = vector.broadcast %26 : vector<1x128xf32> to vector<8x128xf32>
    %28 = arith.mulf %25, %27 : vector<8x128xf32>
    %c0_13 = arith.constant 0 : index
    %c0_14 = arith.constant 0 : index
    %29 = vector.load %arg5[%c0_13, %c0_14] : memref<1x128xf32, #tpu.memory_space<vmem>>, vector<1x128xf32>
    %30 = vector.broadcast %29 : vector<1x128xf32> to vector<8x128xf32>
    %31 = arith.addf %28, %30 : vector<8x128xf32>
    %c0_15 = arith.constant 0 : index
    %c0_16 = arith.constant 0 : index
    %32 = vector.load %arg6[%c0_15, %c0_16] : memref<8x128xf32, #tpu.memory_space<vmem>>, vector<8x128xf32>
    tpu.vector_store %arg6[%c0_15, %c0_16], %31 {strides = array<i32>} : memref<8x128xf32, #tpu.memory_space<vmem>>, vector<8x128xf32>,
    return
  }
  func.func @transform_0(%arg0: i32) -> (i32, i32) {
    %c0_i32 = arith.constant 0 : i32
    %c0_i32_0 = arith.constant 0 : i32
    return %arg0, %c0_i32 : i32, i32
  }
  func.func @transform_1(%arg0: i32) -> (i32, i32) {
    %c0_i32 = arith.constant 0 : i32
    %c0_i32_0 = arith.constant 0 : i32
    %c0_i32_1 = arith.constant 0 : i32
    return %c0_i32, %c0_i32_0 : i32, i32
  }
  func.func @transform_2(%arg0: i32) -> (i32, i32) {
    %c0_i32 = arith.constant 0 : i32
    %c0_i32_0 = arith.constant 0 : i32
    %c0_i32_1 = arith.constant 0 : i32
    return %c0_i32, %c0_i32_0 : i32, i32
  }
  func.func @transform_3(%arg0: i32) -> (i32, i32) {
    %c0_i32 = arith.constant 0 : i32
    %c0_i32_0 = arith.constant 0 : i32
    %c0_i32_1 = arith.constant 0 : i32
    return %c0_i32, %c0_i32_0 : i32, i32
  }
  func.func @transform_4(%arg0: i32) -> (i32, i32) {
    %c0_i32 = arith.constant 0 : i32
    %c0_i32_0 = arith.constant 0 : i32
    %c0_i32_1 = arith.constant 0 : i32
    return %c0_i32, %c0_i32_0 : i32, i32
  }
  func.func @transform_5(%arg0: i32) -> (i32, i32) {
    %c0_i32 = arith.constant 0 : i32
    %c0_i32_0 = arith.constant 0 : i32
    return %arg0, %c0_i32 : i32, i32
  }
}

</mosaic_0001>

<llo_original>
// kernel: tpu_custom_call.1
$region0: #{tpu_custom_call.1}
  #allocation0 [shape = 'u32[]', space=smem, size = 0x4, offset = 0x4, fixed_abs, tag = 'smem constant byte address 0x4 - core index']
  #allocation1 [shape = 'u32[144,128]{1,0:T(1,128)}', space=vmem, size = 0x12000, scoped, tag = 'internal scratch']
  %s0 = inlined_call_operand.hbm [shape: f32[8,256], index: 0, kind: input, shape index: {}]
  %s1 = inlined_call_operand.hbm [shape: f32[256,128], index: 1, kind: input, shape index: {}]
  %s2 = inlined_call_operand.vmem [shape: f32[1,128], index: 2, kind: input, shape index: {}]
  %s3 = inlined_call_operand.vmem [shape: f32[1,128], index: 3, kind: input, shape index: {}]
  %s4 = inlined_call_operand.vmem [shape: f32[1,128], index: 4, kind: input, shape index: {}]
  %s5 = inlined_call_operand.hbm [shape: f32[8,128], index: 5, kind: output, shape index: {}]
  %s6 = sld [smem:[#allocation0]]
  $region38: #{tpu_custom_call.1} parent=0
    _
  %s8 = ssub.s32 1, %s6
  %s9 = scalar_select 0, %s8, %s6
  $region1: #{tpu_custom_call.1} parent=0
    #allocation2 [shape = 'u8[8192]{0}', space=vmem, size = 0x2000, scoped, tag = 'input window, operand 0, single buffered']
    #allocation3 [shape = 's32[1]{0}', space=sflag, size = 0x4, scoped, tag = 'scoped memory for tpu_custom_call.1']
    #allocation4 [shape = 's32[1]{0}', space=sflag, size = 0x4, scoped, tag = 'scoped memory for tpu_custom_call.1']
    #allocation5 [shape = 'u8[131072]{0}', space=vmem, size = 0x20000, scoped, tag = 'input window, operand 1, single buffered']
    #allocation6 [shape = 's32[1]{0}', space=sflag, size = 0x4, scoped, tag = 'scoped memory for tpu_custom_call.1']
    #allocation7 [shape = 'u8[4096]{0}', space=vmem, size = 0x1000, scoped, tag = 'output window, operand 0, single buffered']
    %10 = vsyncpa [#allocation3], 0
    %11 = vsyncpa [#allocation6], 0
    %12 = vsyncpa [#allocation4], 0
    // Predicated region
    $region2: #{tpu_custom_call.1} parent=1 // pred_check
      _
    $region3: #{tpu_custom_call.1} parent=1 // pred_check_branch
      %14 = sbr.rel (0) target = $region5
    $region4: #{tpu_custom_call.1} parent=1 // pred_region
      %s16 = ssub.s32 256, 256
      %17 = vsyncadd [#allocation3], %s16
      %s19 = sshll.u32 [#allocation2], 4
      %s20 = int_to_ptr.vmem [resolvable:$true] %s19
      %22 = dma.hbm_to_vmem [thread:$0]  %s0, 256, %s20, [#allocation3]
    $region5: #{tpu_custom_call.1} parent=1 // pred_fallthru
      _
    // Predicated region
    $region6: #{tpu_custom_call.1} parent=1 // pred_check
      _
    $region7: #{tpu_custom_call.1} parent=1 // pred_check_branch
      %24 = sbr.rel (0) target = $region9
    $region8: #{tpu_custom_call.1} parent=1 // pred_region
      %s26 = ssub.s32 4096, 4096
      %27 = vsyncadd [#allocation6], %s26
      %s28 = sshll.u32 [#allocation5], 4
      %s29 = int_to_ptr.vmem [resolvable:$true] %s28
      %34 = dma.hbm_to_vmem [thread:$0]  %s1, 4096, %s29, [#allocation6], 128, 128, 8
    $region9: #{tpu_custom_call.1} parent=1 // pred_fallthru
      _
    // Predicated region
    $region10: #{tpu_custom_call.1} parent=1 // pred_check
      _
    $region11: #{tpu_custom_call.1} parent=1 // pred_check_branch
      %36 = sbr.rel (0) target = $region13
    $region12: #{tpu_custom_call.1} parent=1 // pred_region
      _
    $region13: #{tpu_custom_call.1} parent=1 // pred_fallthru
      _
    // Predicated region
    $region14: #{tpu_custom_call.1} parent=1 // pred_check
      _
    $region15: #{tpu_custom_call.1} parent=1 // pred_check_branch
      %38 = sbr.rel (0) target = $region17
    $region16: #{tpu_custom_call.1} parent=1 // pred_region
      _
    $region17: #{tpu_custom_call.1} parent=1 // pred_fallthru
      _
    // Predicated region
    $region18: #{tpu_custom_call.1} parent=1 // pred_check
      _
    $region19: #{tpu_custom_call.1} parent=1 // pred_check_branch
      %40 = sbr.rel (0) target = $region21
    $region20: #{tpu_custom_call.1} parent=1 // pred_region
      _
    $region21: #{tpu_custom_call.1} parent=1 // pred_fallthru
      _
    // Predicated region
    $region22: #{tpu_custom_call.1} parent=1 // pred_check
      _
    $region23: #{tpu_custom_call.1} parent=1 // pred_check_branch
      %42 = sbr.rel (0) target = $region25
    $region24: #{tpu_custom_call.1} parent=1 // pred_region
      %43 = dma.done [#allocation3], 256
    $region25: #{tpu_custom_call.1} parent=1 // pred_fallthru
      _
    // Predicated region
    $region26: #{tpu_custom_call.1} parent=1 // pred_check
      _
    $region27: #{tpu_custom_call.1} parent=1 // pred_check_branch
      %45 = sbr.rel (0) target = $region29
    $region28: #{tpu_custom_call.1} parent=1 // pred_region
      %46 = dma.done [#allocation6], 4096
    $region29: #{tpu_custom_call.1} parent=1 // pred_fallthru
      _
    %v47 = vld [vmem:[#allocation2] sm:$0xff]
    %v48 = vld [vmem:[#allocation2 + $0x8] sm:$0xff]
    %v49 = vld [vmem:[#allocation5] sm:$0xff]
    %v50 = vld [vmem:[#allocation5 + $0x8] sm:$0xff]
    %v51 = vld [vmem:[#allocation5 + $0x10] sm:$0xff]
    %v52 = vld [vmem:[#allocation5 + $0x18] sm:$0xff]
    %v53 = vld [vmem:[#allocation5 + $0x20] sm:$0xff]
    %v54 = vld [vmem:[#allocation5 + $0x28] sm:$0xff]
    %v55 = vld [vmem:[#allocation5 + $0x30] sm:$0xff]
    %v56 = vld [vmem:[#allocation5 + $0x38] sm:$0xff]
    %v57 = vld [vmem:[#allocation5 + $0x40] sm:$0xff]
    %v58 = vld [vmem:[#allocation5 + $0x48] sm:$0xff]
    %v59 = vld [vmem:[#allocation5 + $0x50] sm:$0xff]
    %v60 = vld [vmem:[#allocation5 + $0x58] sm:$0xff]
    %v61 = vld [vmem:[#allocation5 + $0x60] sm:$0xff]
    %v62 = vld [vmem:[#allocation5 + $0x68] sm:$0xff]
    %v63 = vld [vmem:[#allocation5 + $0x70] sm:$0xff]
    %v64 = vld [vmem:[#allocation5 + $0x78] sm:$0xff]
    %v65 = vld [vmem:[#allocation5 + $0x80] sm:$0xff]
    %v66 = vld [vmem:[#allocation5 + $0x88] sm:$0xff]
    %v67 = vld [vmem:[#allocation5 + $0x90] sm:$0xff]
    %v68 = vld [vmem:[#allocation5 + $0x98] sm:$0xff]
    %v69 = vld [vmem:[#allocation5 + $0xa0] sm:$0xff]
    %v70 = vld [vmem:[#allocation5 + $0xa8] sm:$0xff]
    %v71 = vld [vmem:[#allocation5 + $0xb0] sm:$0xff]
    %v72 = vld [vmem:[#allocation5 + $0xb8] sm:$0xff]
    %v73 = vld [vmem:[#allocation5 + $0xc0] sm:$0xff]
    %v74 = vld [vmem:[#allocation5 + $0xc8] sm:$0xff]
    %v75 = vld [vmem:[#allocation5 + $0xd0] sm:$0xff]
    %v76 = vld [vmem:[#allocation5 + $0xd8] sm:$0xff]
    %v77 = vld [vmem:[#allocation5 + $0xe0] sm:$0xff]
    %v78 = vld [vmem:[#allocation5 + $0xe8] sm:$0xff]
    %v79 = vld [vmem:[#allocation5 + $0xf0] sm:$0xff]
    %v80 = vld [vmem:[#allocation5 + $0xf8] sm:$0xff]
    %v81 = vld [vmem:[%s2] sm:$0x1]
    %v83 = vlaneseq
    %v84 = vshrl.u32 %v83, 7
    %v85 = vsub.s32 0, %v84
    %v86 = vrot.slane %v81, %v85
    %88 = vmatprep.subr.mxu0 0.0
    %89 = vmatpush1.msra.mxu0 %v64
    %90 = vmatprep.subr.mxu0 0.0
    %91 = vmatpush1.msra.mxu0 %v63
    %92 = vmatprep.subr.mxu0 0.0
    %93 = vmatpush1.msra.mxu0 %v62
    %94 = vmatprep.subr.mxu0 0.0
    %95 = vmatpush1.msra.mxu0 %v61
    %96 = vmatprep.subr.mxu0 0.0
    %97 = vmatpush1.msra.mxu0 %v60
    %98 = vmatprep.subr.mxu0 0.0
    %99 = vmatpush1.msra.mxu0 %v59
    %100 = vmatprep.subr.mxu0 0.0
    %101 = vmatpush1.msra.mxu0 %v58
    %102 = vmatprep.subr.mxu0 0.0
    %103 = vmatpush1.msra.mxu0 %v57
    %104 = vmatprep.subr.mxu0 0.0
    %105 = vmatpush1.msra.mxu0 %v56
    %106 = vmatprep.subr.mxu0 0.0
    %107 = vmatpush1.msra.mxu0 %v55
    %108 = vmatprep.subr.mxu0 0.0
    %109 = vmatpush1.msra.mxu0 %v54
    %110 = vmatprep.subr.mxu0 0.0
    %111 = vmatpush1.msra.mxu0 %v53
    %112 = vmatprep.subr.mxu0 0.0
    %113 = vmatpush1.msra.mxu0 %v52
    %114 = vmatprep.subr.mxu0 0.0
    %115 = vmatpush1.msra.mxu0 %v51
    %116 = vmatprep.subr.mxu0 0.0
    %117 = vmatpush1.msra.mxu0 %v50
    %118 = vmatprep.subr.mxu0 0.0
    %119 = vmatpush1.msra.mxu0 %v49
    %120 = vmatprep.subr.mxu0 0.0
    %121 = vmatpush2.msra.mxu0 %v80
    %122 = vmatprep.subr.mxu0 0.0
    %123 = vmatpush2.msra.mxu0 %v79
    %124 = vmatprep.subr.mxu0 0.0
    %125 = vmatpush2.msra.mxu0 %v78
    %126 = vmatprep.subr.mxu0 0.0
    %127 = vmatpush2.msra.mxu0 %v77
    %128 = vmatprep.subr.mxu0 0.0
    %129 = vmatpush2.msra.mxu0 %v76
    %130 = vmatprep.subr.mxu0 0.0
    %131 = vmatpush2.msra.mxu0 %v75
    %132 = vmatprep.subr.mxu0 0.0
    %133 = vmatpush2.msra.mxu0 %v74
    %134 = vmatprep.subr.mxu0 0.0
    %135 = vmatpush2.msra.mxu0 %v73
    %136 = vmatprep.subr.mxu0 0.0
    %137 = vmatpush2.msra.mxu0 %v72
    %138 = vmatprep.subr.mxu0 0.0
    %139 = vmatpush2.msra.mxu0 %v71
    %140 = vmatprep.subr.mxu0 0.0
    %141 = vmatpush2.msra.mxu0 %v70
    %142 = vmatprep.subr.mxu0 0.0
    %143 = vmatpush2.msra.mxu0 %v69
    %144 = vmatprep.subr.mxu0 0.0
    %145 = vmatpush2.msra.mxu0 %v68
    %146 = vmatprep.subr.mxu0 0.0
    %147 = vmatpush2.msra.mxu0 %v67
    %148 = vmatprep.subr.mxu0 0.0
    %149 = vmatpush2.msra.mxu0 %v66
    %150 = vmatprep.subr.mxu0 0.0
    %151 = vmatpush2.msra.mxu0 %v65
    %152 = vmatprep.mubr.f32.mxu0 %v48
    %153 = vmatmul.mubr.f32.gmra.mxu0 %v47
    %v154 = vpop.f32.mrf.mxu0
    %v155 = vadd.f32 %v86, %v154
    %v156 = vpop.f32.mrf.mxu0
    %157 = vdwg.mxu0
    %158 = vadd.xlane.f32.xlu0 %v155
    %v159 = vpop.xlane.xlu0 %158
    %v160 = vmul.f32 %v155, %v155
    %161 = vadd.xlane.f32.xlu0 %v160
    %v162 = vpop.xlane.xlu0 %161
    %v163 = vmul.f32 %v159, 0.0078125
    %v164 = vmul.f32 %v162, 0.0078125
    %v165 = vmul.f32 %v163, %v163
    %v166 = vsub.f32 %v164, %v165
    %v167 = vmax.f32 %v166, 0.0
    %v168 = vsub.f32 %v155, %v163
    %v169 = vadd.f32 %v167, 1e-05
    %v170 = vrsqrt.pop %v169
    %v171 = vmul.f32 %v168, %v170
    %v172 = vld [vmem:[%s3] sm:$0x1]
    %v174 = vlaneseq
    %v175 = vshrl.u32 %v174, 7
    %v176 = vsub.s32 0, %v175
    %v177 = vrot.slane %v172, %v176
    %v179 = vmul.f32 %v171, %v177
    %v180 = vld [vmem:[%s4] sm:$0x1]
    %v182 = vlaneseq
    %v183 = vshrl.u32 %v182, 7
    %v184 = vsub.s32 0, %v183
    %v185 = vrot.slane %v180, %v184
    %v187 = vadd.f32 %v179, %v185
    %188 = vst [vmem:[#allocation7] sm:$0xff] %v187
    // Predicated region
    $region30: #{tpu_custom_call.1} parent=1 // pred_check
      _
    $region31: #{tpu_custom_call.1} parent=1 // pred_check_branch
      %190 = sbr.rel (0) target = $region33
    $region32: #{tpu_custom_call.1} parent=1 // pred_region
      %s192 = ssub.s32 128, 128
      %193 = vsyncadd [#allocation4], %s192
      %s195 = sshll.u32 [#allocation7], 4
      %s196 = int_to_ptr.vmem [resolvable:$true] %s195
      %198 = dma.vmem_to_hbm [thread:$0]  %s196, 128, %s5, [#allocation4]
    $region33: #{tpu_custom_call.1} parent=1 // pred_fallthru
      _
    // Predicated region
    $region34: #{tpu_custom_call.1} parent=1 // pred_check
      _
    $region35: #{tpu_custom_call.1} parent=1 // pred_check_branch
      %200 = sbr.rel (0) target = $region37
    $region36: #{tpu_custom_call.1} parent=1 // pred_region
      %201 = dma.done [#allocation4], 128
    $region37: #{tpu_custom_call.1} parent=1 // pred_fallthru
      _
    %202 = vsyncpa [#allocation3], 1
    %203 = vsyncpa [#allocation6], 1
    %204 = vsyncpa [#allocation4], 1

</llo_original>
